<compile_context>
chip_gen: v7x
topology: tpu7x:2x2x1
jax: 0.10.0
libtpu: 0.0.40
codegen_flags: <defaults>
</compile_context>

<pallas_src>
import functools

import jax
import jax.numpy as jnp
from jax import lax
from jax.experimental import pallas as pl
from jax.experimental.pallas import tpu as pltpu


def _dwconv3x3_kernel(ids_ref, w_ref, b_ref, x_ref, o_ref, *, H, W, CB):
    """One (batch, channel-block) step of the depthwise 3x3 conv.

    ids_ref : VMEM (2, H*W) int32   row index / col index per flattened position
    w_ref   : VMEM (CB, 9)  f32     per-channel taps, k = kh*3 + kw
    b_ref   : VMEM (CB, 1)  f32     per-channel bias
    x_ref   : VMEM (1, CB, H*W)     input slab (channels on sublanes, spatial on lanes)
    o_ref   : VMEM (1, CB, H*W)     output slab
    """
    HW = H * W
    x = x_ref[0, :, :].astype(jnp.float32)           # (CB, HW)
    w = w_ref[...].astype(jnp.float32)                # (CB, 9)
    b = b_ref[...].astype(jnp.float32)                # (CB, 1)

    # Boundary masks (hoisted, computed once per grid step).
    row = jnp.broadcast_to(ids_ref[0:1, :], (CB, HW))
    col = jnp.broadcast_to(ids_ref[1:2, :], (CB, HW))
    m_top = row >= 1          # tap reads row-1  -> valid when dh == 0
    m_bot = row <= H - 2      # tap reads row+1  -> valid when dh == 2
    m_left = col >= 1         # tap reads col-1  -> valid when dw == 0
    m_right = col <= W - 2    # tap reads col+1  -> valid when dw == 2

    # Center tap + bias initialize the accumulator (saves one full add pass).
    acc = x * w[:, 4:5] + b

    for dh in range(3):
        for dw in range(3):
            if dh == 1 and dw == 1:
                continue
            k = dh * 3 + dw
            off = (dh - 1) * W + (dw - 1)             # flattened source offset
            # shifted[p] = x[p + off]  (circular; wrapped lanes are masked below)
            shifted = pltpu.roll(x, shift=(-off) % HW, axis=1)

            mask = None
            if dh == 0:
                mask = m_top
            elif dh == 2:
                mask = m_bot
            if dw == 0:
                mask = m_left if mask is None else jnp.logical_and(mask, m_left)
            elif dw == 2:
                mask = m_right if mask is None else jnp.logical_and(mask, m_right)

            contrib = shifted * w[:, k:k + 1]
            # Select (not multiply) so 0*inf / 0*NaN can never leak into the output.
            contrib = jnp.where(mask, contrib, 0.0)
            acc = acc + contrib

    o_ref[0, :, :] = acc.astype(o_ref.dtype)


def _pick_channel_block(C, HW):
    """Largest multiple-of-8 divisor of C whose f32 working block stays small.

    Falls back to CB = C (legal: block dim equal to the full array dim) when C is
    not a multiple of 8 (tiny / odd channel counts).
    """
    if C % 8 != 0:
        return C
    budget = 1536 * 1024                   # bytes of f32 per (CB, HW) working copy
    cb = 8
    for cand in range(16, C + 1, 8):
        if C % cand == 0 and cand * HW * 4 <= budget:
            cb = cand
    return cb


def _vmem_limit_bytes(CB, HW, itemsize):
    blk_io = CB * HW * itemsize            # one I/O block
    blk_f32 = CB * HW * 4                  # one f32 working copy
    ids = 2 * HW * 4
    need = 4 * blk_io + 10 * blk_f32 + 2 * ids + (4 << 20)
    return int(min(max(need, 16 << 20), 48 << 20))


def mspdwconv_pallas(x, weight, bias, *, channel_block=None):
    """Forward of MSPDWConv.  x: (N, C, H, W); weight: (C, 1, 3, 3); bias: (C,)."""
    N, C, H, W = x.shape
    assert weight.shape == (C, 1, 3, 3)
    assert bias.shape == (C,)
    HW = H * W

    CB = channel_block if channel_block is not None else _pick_channel_block(C, HW)
    assert C % CB == 0, f"channel block {CB} must divide C={C}"
    assert CB % 8 == 0 or CB == C, f"channel block {CB} must be a multiple of 8 or equal C"

    # Free reshapes only (memory already contiguous in this order); tiny param reshapes.
    x_flat = x.reshape(N, C, HW)
    w_flat = weight.reshape(C, 9).astype(jnp.float32)     # k = kh*3 + kw
    b_col = bias.reshape(C, 1).astype(jnp.float32)

    # Row / column index of each flattened spatial position (fetched once, resident).
    row_ids = jnp.repeat(jnp.arange(H, dtype=jnp.int32), W)
    col_ids = jnp.tile(jnp.arange(W, dtype=jnp.int32), H)
    ids = jnp.stack([row_ids, col_ids], axis=0)           # (2, HW) int32

    kernel = functools.partial(_dwconv3x3_kernel, H=H, W=W, CB=CB)
    grid = (N, C // CB)

    out = pl.pallas_call(
        kernel,
        out_shape=jax.ShapeDtypeStruct((N, C, HW), x.dtype),
        grid_spec=pltpu.PrefetchScalarGridSpec(
            num_scalar_prefetch=0,
            grid=grid,
            in_specs=[
                # row/col ids: constant block index -> DMA'd once, stays in VMEM.
                pl.BlockSpec((2, HW), lambda n, c: (0, 0)),
                # per-channel taps / bias for this channel block (tiny).
                pl.BlockSpec((CB, 9), lambda n, c: (c, 0)),
                pl.BlockSpec((CB, 1), lambda n, c: (c, 0)),
                # input slab: channels on sublanes, flattened plane on lanes.
                pl.BlockSpec((1, CB, HW), lambda n, c: (n, c, 0)),
            ],
            out_specs=pl.BlockSpec((1, CB, HW), lambda n, c: (n, c, 0)),
        ),
        compiler_params=pltpu.CompilerParams(
            dimension_semantics=("parallel", "parallel"),
            vmem_limit_bytes=_vmem_limit_bytes(CB, HW, x.dtype.itemsize),
        ),
    )(ids, w_flat, b_col, x_flat)

    return out.reshape(N, C, H, W)


def _reference(x, weight, bias):
    """Pure-JAX depthwise conv reference (matches PyTorch Conv2d groups=C)."""
    N, C, H, W = x.shape
    x_nhwc = jnp.transpose(x, (0, 2, 3, 1))
    k = jnp.transpose(weight, (2, 3, 1, 0))               # (3, 3, 1, C) HWIO
    y = lax.conv_general_dilated(
        x_nhwc, k, window_strides=(1, 1), padding=((1, 1), (1, 1)),
        dimension_numbers=("NHWC", "HWIO", "NHWC"),
        feature_group_count=C)
    y = y + bias.reshape(1, 1, 1, C)
    return jnp.transpose(y, (0, 3, 1, 2))


if __name__ == "__main__":
    # Small shapes consistent with the module (channels = dim).
    N, C, H, W = 2, 4, 16, 16
    key = jax.random.PRNGKey(0)
    kx, kw, kb = jax.random.split(key, 3)

    x = jax.random.normal(kx, (N, C, H, W), jnp.float32)
    # Deterministic synthetic parameters (not a checkpoint load).
    weight = jax.random.normal(kw, (C, 1, 3, 3), jnp.float32) * 0.1
    bias = jax.random.normal(kb, (C,), jnp.float32) * 0.1

    out = mspdwconv_pallas(x, weight, bias)
    out = jax.block_until_ready(out)

    ref = _reference(x, weight, bias)
    assert out.shape == (N, C, H, W)
    assert jnp.allclose(out, ref, atol=1e-4, rtol=1e-4), float(jnp.max(jnp.abs(out - ref)))

    print("KERNEL_OK")
</pallas_src>

<mosaic_0001>
module attributes {stable_mosaic.version = 11 : i64} {
  func.func @_dwconv3x3_kernel(%arg0: i32, %arg1: i32, %arg2: memref<2x256xi32, #tpu.memory_space<vmem>>, %arg3: memref<4x9xf32, #tpu.memory_space<vmem>>, %arg4: memref<4x1xf32, #tpu.memory_space<vmem>>, %arg5: memref<1x4x256xf32, #tpu.memory_space<vmem>>, %arg6: memref<1x4x256xf32, #tpu.memory_space<vmem>>) attributes {dimension_semantics = [#tpu.dimension_semantics<parallel>, #tpu.dimension_semantics<parallel>], iteration_bounds = array<i64: 2, 1>, scalar_prefetch = 0 : i64, scratch_operands = 0 : i64, tpu.core_type = #tpu.core_type<tc>, window_params = [{pipeline_mode = #tpu.pipeline_mode<synchronous>, transform_indices = @transform_0, window_bounds = array<i64: 2, 256>}, {transform_indices = @transform_1, window_bounds = array<i64: 4, 9>}, {transform_indices = @transform_2, window_bounds = array<i64: 4, 1>}, {transform_indices = @transform_3, window_bounds = array<i64: 1, 4, 256>}, {transform_indices = @transform_4, window_bounds = array<i64: 1, 4, 256>}]} {
    %c0 = arith.constant 0 : index
    %c0_0 = arith.constant 0 : index
    %c0_1 = arith.constant 0 : index
    %0 = vector.load %arg5[%c0, %c0_0, %c0_1] : memref<1x4x256xf32, #tpu.memory_space<vmem>>, vector<1x4x256xf32>
    %1 = vector.shape_cast %0 : vector<1x4x256xf32> to vector<4x256xf32>
    %c0_2 = arith.constant 0 : index
    %c0_3 = arith.constant 0 : index
    %2 = vector.load %arg3[%c0_2, %c0_3] : memref<4x9xf32, #tpu.memory_space<vmem>>, vector<4x9xf32>
    %c0_4 = arith.constant 0 : index
    %c0_5 = arith.constant 0 : index
    %3 = vector.load %arg4[%c0_4, %c0_5] : memref<4x1xf32, #tpu.memory_space<vmem>>, vector<4x1xf32>
    %c0_6 = arith.constant 0 : index
    %c0_7 = arith.constant 0 : index
    %4 = vector.load %arg2[%c0_6, %c0_7] : memref<2x256xi32, #tpu.memory_space<vmem>>, vector<1x256xi32>
    %5 = vector.shape_cast %4 : vector<1x256xi32> to vector<1x256xi32>
    %6 = vector.broadcast %5 : vector<1x256xi32> to vector<4x256xi32>
    %c1 = arith.constant 1 : index
    %c0_8 = arith.constant 0 : index
    %7 = vector.load %arg2[%c1, %c0_8] : memref<2x256xi32, #tpu.memory_space<vmem>>, vector<1x256xi32>
    %8 = vector.shape_cast %7 : vector<1x256xi32> to vector<1x256xi32>
    %9 = vector.broadcast %8 : vector<1x256xi32> to vector<4x256xi32>
    %c1_i32 = arith.constant 1 : i32
    %10 = vector.broadcast %c1_i32 : i32 to vector<4x256xi32>
    %11 = arith.cmpi sge, %6, %10 : vector<4x256xi32>
    %c14_i32 = arith.constant 14 : i32
    %12 = vector.broadcast %c14_i32 : i32 to vector<4x256xi32>
    %13 = arith.cmpi sle, %6, %12 : vector<4x256xi32>
    %c1_i32_9 = arith.constant 1 : i32
    %14 = vector.broadcast %c1_i32_9 : i32 to vector<4x256xi32>
    %15 = arith.cmpi sge, %9, %14 : vector<4x256xi32>
    %c14_i32_10 = arith.constant 14 : i32
    %16 = vector.broadcast %c14_i32_10 : i32 to vector<4x256xi32>
    %17 = arith.cmpi sle, %9, %16 : vector<4x256xi32>
    %18 = vector.extract_strided_slice %2 {offsets = [0, 4], sizes = [4, 1], strides = [1, 1]} : vector<4x9xf32> to vector<4x1xf32>
    %19 = vector.broadcast %18 : vector<4x1xf32> to vector<4x256xf32>
    %20 = arith.mulf %1, %19 : vector<4x256xf32>
    %21 = vector.broadcast %3 : vector<4x1xf32> to vector<4x256xf32>
    %22 = arith.addf %20, %21 : vector<4x256xf32>
    %c17_i32 = arith.constant 17 : i32
    %23 = tpu.dynamic_rotate %1 by %c17_i32 dim 1 : vector<4x256xf32>, i32 -> vector<4x256xf32>
    %24 = arith.andi %11, %15 : vector<4x256xi1>
    %25 = vector.extract_strided_slice %2 {offsets = [0, 0], sizes = [4, 1], strides = [1, 1]} : vector<4x9xf32> to vector<4x1xf32>
    %26 = vector.broadcast %25 : vector<4x1xf32> to vector<4x256xf32>
    %27 = arith.mulf %23, %26 : vector<4x256xf32>
    %cst = arith.constant 0.000000e+00 : f32
    %28 = vector.broadcast %cst : f32 to vector<4x256xf32>
    %29 = arith.select %24, %27, %28 : vector<4x256xi1>, vector<4x256xf32>
    %30 = arith.addf %22, %29 : vector<4x256xf32>
    %c16_i32 = arith.constant 16 : i32
    %31 = tpu.dynamic_rotate %1 by %c16_i32 dim 1 : vector<4x256xf32>, i32 -> vector<4x256xf32>
    %32 = vector.extract_strided_slice %2 {offsets = [0, 1], sizes = [4, 1], strides = [1, 1]} : vector<4x9xf32> to vector<4x1xf32>
    %33 = vector.broadcast %32 : vector<4x1xf32> to vector<4x256xf32>
    %34 = arith.mulf %31, %33 : vector<4x256xf32>
    %cst_11 = arith.constant 0.000000e+00 : f32
    %35 = vector.broadcast %cst_11 : f32 to vector<4x256xf32>
    %36 = arith.select %11, %34, %35 : vector<4x256xi1>, vector<4x256xf32>
    %37 = arith.addf %30, %36 : vector<4x256xf32>
    %c15_i32 = arith.constant 15 : i32
    %38 = tpu.dynamic_rotate %1 by %c15_i32 dim 1 : vector<4x256xf32>, i32 -> vector<4x256xf32>
    %39 = arith.andi %11, %17 : vector<4x256xi1>
    %40 = vector.extract_strided_slice %2 {offsets = [0, 2], sizes = [4, 1], strides = [1, 1]} : vector<4x9xf32> to vector<4x1xf32>
    %41 = vector.broadcast %40 : vector<4x1xf32> to vector<4x256xf32>
    %42 = arith.mulf %38, %41 : vector<4x256xf32>
    %cst_12 = arith.constant 0.000000e+00 : f32
    %43 = vector.broadcast %cst_12 : f32 to vector<4x256xf32>
    %44 = arith.select %39, %42, %43 : vector<4x256xi1>, vector<4x256xf32>
    %45 = arith.addf %37, %44 : vector<4x256xf32>
    %c1_i32_13 = arith.constant 1 : i32
    %46 = tpu.dynamic_rotate %1 by %c1_i32_13 dim 1 : vector<4x256xf32>, i32 -> vector<4x256xf32>
    %47 = vector.extract_strided_slice %2 {offsets = [0, 3], sizes = [4, 1], strides = [1, 1]} : vector<4x9xf32> to vector<4x1xf32>
    %48 = vector.broadcast %47 : vector<4x1xf32> to vector<4x256xf32>
    %49 = arith.mulf %46, %48 : vector<4x256xf32>
    %cst_14 = arith.constant 0.000000e+00 : f32
    %50 = vector.broadcast %cst_14 : f32 to vector<4x256xf32>
    %51 = arith.select %15, %49, %50 : vector<4x256xi1>, vector<4x256xf32>
    %52 = arith.addf %45, %51 : vector<4x256xf32>
    %c255_i32 = arith.constant 255 : i32
    %53 = tpu.dynamic_rotate %1 by %c255_i32 dim 1 : vector<4x256xf32>, i32 -> vector<4x256xf32>
    %54 = vector.extract_strided_slice %2 {offsets = [0, 5], sizes = [4, 1], strides = [1, 1]} : vector<4x9xf32> to vector<4x1xf32>
    %55 = vector.broadcast %54 : vector<4x1xf32> to vector<4x256xf32>
    %56 = arith.mulf %53, %55 : vector<4x256xf32>
    %cst_15 = arith.constant 0.000000e+00 : f32
    %57 = vector.broadcast %cst_15 : f32 to vector<4x256xf32>
    %58 = arith.select %17, %56, %57 : vector<4x256xi1>, vector<4x256xf32>
    %59 = arith.addf %52, %58 : vector<4x256xf32>
    %c241_i32 = arith.constant 241 : i32
    %60 = tpu.dynamic_rotate %1 by %c241_i32 dim 1 : vector<4x256xf32>, i32 -> vector<4x256xf32>
    %61 = arith.andi %13, %15 : vector<4x256xi1>
    %62 = vector.extract_strided_slice %2 {offsets = [0, 6], sizes = [4, 1], strides = [1, 1]} : vector<4x9xf32> to vector<4x1xf32>
    %63 = vector.broadcast %62 : vector<4x1xf32> to vector<4x256xf32>
    %64 = arith.mulf %60, %63 : vector<4x256xf32>
    %cst_16 = arith.constant 0.000000e+00 : f32
    %65 = vector.broadcast %cst_16 : f32 to vector<4x256xf32>
    %66 = arith.select %61, %64, %65 : vector<4x256xi1>, vector<4x256xf32>
    %67 = arith.addf %59, %66 : vector<4x256xf32>
    %c240_i32 = arith.constant 240 : i32
    %68 = tpu.dynamic_rotate %1 by %c240_i32 dim 1 : vector<4x256xf32>, i32 -> vector<4x256xf32>
    %69 = vector.extract_strided_slice %2 {offsets = [0, 7], sizes = [4, 1], strides = [1, 1]} : vector<4x9xf32> to vector<4x1xf32>
    %70 = vector.broadcast %69 : vector<4x1xf32> to vector<4x256xf32>
    %71 = arith.mulf %68, %70 : vector<4x256xf32>
    %cst_17 = arith.constant 0.000000e+00 : f32
    %72 = vector.broadcast %cst_17 : f32 to vector<4x256xf32>
    %73 = arith.select %13, %71, %72 : vector<4x256xi1>, vector<4x256xf32>
    %74 = arith.addf %67, %73 : vector<4x256xf32>
    %c239_i32 = arith.constant 239 : i32
    %75 = tpu.dynamic_rotate %1 by %c239_i32 dim 1 : vector<4x256xf32>, i32 -> vector<4x256xf32>
    %76 = arith.andi %13, %17 : vector<4x256xi1>
    %77 = vector.extract_strided_slice %2 {offsets = [0, 8], sizes = [4, 1], strides = [1, 1]} : vector<4x9xf32> to vector<4x1xf32>
    %78 = vector.broadcast %77 : vector<4x1xf32> to vector<4x256xf32>
    %79 = arith.mulf %75, %78 : vector<4x256xf32>
    %cst_18 = arith.constant 0.000000e+00 : f32
    %80 = vector.broadcast %cst_18 : f32 to vector<4x256xf32>
    %81 = arith.select %76, %79, %80 : vector<4x256xi1>, vector<4x256xf32>
    %82 = arith.addf %74, %81 : vector<4x256xf32>
    %c0_19 = arith.constant 0 : index
    %c0_20 = arith.constant 0 : index
    %c0_21 = arith.constant 0 : index
    %83 = vector.load %arg6[%c0_19, %c0_20, %c0_21] : memref<1x4x256xf32, #tpu.memory_space<vmem>>, vector<1x4x256xf32>
    %84 = vector.shape_cast %83 : vector<1x4x256xf32> to vector<4x256xf32>
    %85 = vector.shape_cast %82 : vector<4x256xf32> to vector<1x4x256xf32>
    tpu.vector_store %arg6[%c0_19, %c0_20, %c0_21], %85 {strides = array<i32>} : memref<1x4x256xf32, #tpu.memory_space<vmem>>, vector<1x4x256xf32>,
    return
  }
  func.func @transform_0(%arg0: i32, %arg1: i32) -> (i32, i32) {
    %c0_i32 = arith.constant 0 : i32
    %c0_i32_0 = arith.constant 0 : i32
    %c0_i32_1 = arith.constant 0 : i32
    return %c0_i32, %c0_i32_0 : i32, i32
  }
  func.func @transform_1(%arg0: i32, %arg1: i32) -> (i32, i32) {
    %c0_i32 = arith.constant 0 : i32
    %c0_i32_0 = arith.constant 0 : i32
    return %arg1, %c0_i32 : i32, i32
  }
  func.func @transform_2(%arg0: i32, %arg1: i32) -> (i32, i32) {
    %c0_i32 = arith.constant 0 : i32
    %c0_i32_0 = arith.constant 0 : i32
    return %arg1, %c0_i32 : i32, i32
  }
  func.func @transform_3(%arg0: i32, %arg1: i32) -> (i32, i32, i32) {
    %c0_i32 = arith.constant 0 : i32
    %c0_i32_0 = arith.constant 0 : i32
    return %arg0, %arg1, %c0_i32 : i32, i32, i32
  }
  func.func @transform_4(%arg0: i32, %arg1: i32) -> (i32, i32, i32) {
    %c0_i32 = arith.constant 0 : i32
    %c0_i32_0 = arith.constant 0 : i32
    return %arg0, %arg1, %c0_i32 : i32, i32, i32
  }
}

</mosaic_0001>

<llo_original>
// kernel: tpu_custom_call.1
$region0: #{tpu_custom_call.1}
  #allocation0 [shape = 'u32[]', space=smem, size = 0x4, offset = 0x4, fixed_abs, tag = 'smem constant byte address 0x4 - core index']
  #allocation1 [shape = 'u32[144,128]{1,0:T(1,128)}', space=vmem, size = 0x12000, scoped, tag = 'internal scratch']
  %s0 = inlined_call_operand.hbm [shape: s32[2,256], index: 0, kind: input, shape index: {}]
  %s1 = inlined_call_operand.hbm [shape: f32[4,9], index: 1, kind: input, shape index: {}]
  %s2 = inlined_call_operand.vmem [shape: f32[4,1], index: 2, kind: input, shape index: {}]
  %s3 = inlined_call_operand.vmem [shape: f32[2,4,256], index: 3, kind: input, shape index: {}]
  %s4 = inlined_call_operand.hbm [shape: f32[2,4,256], index: 4, kind: output, shape index: {}]
  %s5 = sld [smem:[#allocation0]]
  $region57: #{tpu_custom_call.1} parent=0
    _
  %s7 = ssub.s32 1, %s5
  %s8 = scalar_select 0, %s7, %s5
  $region1: #{tpu_custom_call.1} parent=0
    #allocation2 [shape = 'u8[2048]{0}', space=vmem, size = 0x800, scoped, tag = 'input window, operand 0, single buffered']
    #allocation3 [shape = 's32[2]{0}', space=sflag, size = 0x8, scoped, tag = 'scoped memory for tpu_custom_call.1']
    #allocation4 [shape = 's32[2]{0}', space=sflag, size = 0x8, scoped, tag = 'scoped memory for tpu_custom_call.1']
    #allocation5 [shape = 'u8[2048]{0}', space=vmem, size = 0x800, scoped, tag = 'input window, operand 1, single buffered']
    #allocation6 [shape = 's32[1]{0}', space=sflag, size = 0x4, scoped, tag = 'scoped memory for tpu_custom_call.1']
    #allocation7 [shape = 'u8[8192]{0}', space=vmem, size = 0x2000, scoped, tag = 'output window, operand 0']
    %9 = vsyncpa [#allocation3], 0
    %10 = vsyncpa [#allocation6], 0
    %11 = vsyncpa [#allocation4], 0
    %s12 = scalar_lea.sflag [#allocation4], 1
    %13 = vsyncpa %s12, 0
    loop: start=0, step=1, limit=4
    $region2: #{tpu_custom_call.1} parent=1 // loop_pre_header
      _
    $region3: #{tpu_custom_call.1} parent=1 // loop_header
      %s15 = sphi 0, %s19
      %p16 = scmp.ge.s32.totalorder %s15, 4
      %s22 = sphi 0, %s34
      %s23 = sphi 0, %s30
      %s24 = sphi 0, %s22
      %s25 = sphi 0, %s23
      %s26 = sphi 0, %s24
      %s27 = sphi 0, %s25
      %s35 = sphi 0, %s35
      %s37 = sphi 0, %s35
      %s38 = sphi 0, %s37
      %s52 = sphi 0, %s38
      %s58 = sphi 0, %s60
      %s61 = sphi 0, %s58
      %s62 = sphi 0, %s61
      %s78 = sphi 0, %s62
      %s84 = sphi 0, %s86
      %s87 = sphi 0, %s84
      %s88 = sphi 0, %s87
      %s104 = sphi 0, %s88
      %s112 = sphi 0, %s114
      %s115 = sphi 0, %s112
      %s116 = sphi 0, %s115
      %s132 = sphi 0, %s116
      %s140 = sphi 0, %s142
      %s143 = sphi 0, %s140
      %s144 = sphi 0, %s143
      %s160 = sphi 0, %s144
    $region4: #{tpu_custom_call.1} parent=1 // loop_header_branch
      %18 = sbr.rel (%p16) target = $region8
    $region5: #{tpu_custom_call.1} parent=1 // loop_body
      %s20 = ssub.s32 %s15, 1
      %s21 = ssub.s32 %s15, 2
      %s28 = sadd.s32 1, %s23
      %p29 = scmp.ge.s32.totalorder %s28, 1
      %s30 = scalar_select %p29, 0, %s28
      %s31 = sadd.s32 1, %s22
      %s32 = scalar_select %p29, %s31, %s22
      %p33 = scmp.ge.s32.totalorder %s32, 2
      %s34 = scalar_select %p33, 0, %s32
      %s36 = sadd.s32 %s35, 1
      %p39 = scmp.eq.s32.totalorder %s15, 1
      %p40 = scmp.ne.s32.totalorder %s35, %s37
      %p41 = scmp.eq.s32.totalorder %s15, 0
      %p42 = por %p40, %p41
      %p43 = scmp.ne.s32.totalorder %s35, %s37
      %p44 = scmp.eq.s32.totalorder %s20, 1
      %p45 = por %p43, %p44
      %p46 = scmp.ne.s32.totalorder %s37, %s38
      %p47 = scmp.eq.s32.totalorder %s20, 0
      %p48 = por %p46, %p47
      %p49 = scmp.ne.s32.totalorder %s37, %s38
      %p50 = scmp.eq.s32.totalorder %s21, 1
      %p51 = por %p49, %p50
      %p53 = scmp.ne.s32.totalorder %s38, %s52
      %p54 = scmp.eq.s32.totalorder %s21, 0
      %p55 = por %p53, %p54
      %s56 = ssub.s32 %s23, %s30
      %p57 = scmp.eq.s32.totalorder %s56, 0
      %s59 = sadd.s32 %s58, 1
      %s60 = scalar_select %p57, %s58, %s59
      %p63 = pneg %p57
      %p64 = scmp.eq.s32.totalorder %s15, 1
      %p65 = por %p63, %p64
      %p66 = scmp.ne.s32.totalorder %s58, %s61
      %p67 = scmp.eq.s32.totalorder %s15, 0
      %p68 = por %p66, %p67
      %p69 = scmp.ne.s32.totalorder %s58, %s61
      %p70 = scmp.eq.s32.totalorder %s20, 1
      %p71 = por %p69, %p70
      %p72 = scmp.ne.s32.totalorder %s61, %s62
      %p73 = scmp.eq.s32.totalorder %s20, 0
      %p74 = por %p72, %p73
      %p75 = scmp.ne.s32.totalorder %s61, %s62
      %p76 = scmp.eq.s32.totalorder %s21, 1
      %p77 = por %p75, %p76
      %p79 = scmp.ne.s32.totalorder %s62, %s78
      %p80 = scmp.eq.s32.totalorder %s21, 0
      %p81 = por %p79, %p80
      %s82 = ssub.s32 %s23, %s30
      %p83 = scmp.eq.s32.totalorder %s82, 0
      %s85 = sadd.s32 %s84, 1
      %s86 = scalar_select %p83, %s84, %s85
      %p89 = pneg %p83
      %p90 = scmp.eq.s32.totalorder %s15, 1
      %p91 = por %p89, %p90
      %p92 = scmp.ne.s32.totalorder %s84, %s87
      %p93 = scmp.eq.s32.totalorder %s15, 0
      %p94 = por %p92, %p93
      %p95 = scmp.ne.s32.totalorder %s84, %s87
      %p96 = scmp.eq.s32.totalorder %s20, 1
      %p97 = por %p95, %p96
      %p98 = scmp.ne.s32.totalorder %s87, %s88
      %p99 = scmp.eq.s32.totalorder %s20, 0
      %p100 = por %p98, %p99
      %p101 = scmp.ne.s32.totalorder %s87, %s88
      %p102 = scmp.eq.s32.totalorder %s21, 1
      %p103 = por %p101, %p102
      %p105 = scmp.ne.s32.totalorder %s88, %s104
      %p106 = scmp.eq.s32.totalorder %s21, 0
      %p107 = por %p105, %p106
      %s108 = ssub.s32 %s22, %s34
      %s109 = ssub.s32 %s23, %s30
      %s110 = sor.u32 %s108, %s109
      %p111 = scmp.eq.s32.totalorder %s110, 0
      %s113 = sadd.s32 %s112, 1
      %s114 = scalar_select %p111, %s112, %s113
      %p117 = pneg %p111
      %p118 = scmp.eq.s32.totalorder %s15, 1
      %p119 = por %p117, %p118
      %p120 = scmp.ne.s32.totalorder %s112, %s115
      %p121 = scmp.eq.s32.totalorder %s15, 0
      %p122 = por %p120, %p121
      %p123 = scmp.ne.s32.totalorder %s112, %s115
      %p124 = scmp.eq.s32.totalorder %s20, 1
      %p125 = por %p123, %p124
      %p126 = scmp.ne.s32.totalorder %s115, %s116
      %p127 = scmp.eq.s32.totalorder %s20, 0
      %p128 = por %p126, %p127
      %p129 = scmp.ne.s32.totalorder %s115, %s116
      %p130 = scmp.eq.s32.totalorder %s21, 1
      %p131 = por %p129, %p130
      %p133 = scmp.ne.s32.totalorder %s116, %s132
      %p134 = scmp.eq.s32.totalorder %s21, 0
      %p135 = por %p133, %p134
      %s136 = ssub.s32 %s22, %s34
      %s137 = ssub.s32 %s23, %s30
      %s138 = sor.u32 %s136, %s137
      %p139 = scmp.eq.s32.totalorder %s138, 0
      %s141 = sadd.s32 %s140, 1
      %s142 = scalar_select %p139, %s140, %s141
      %p145 = pneg %p139
      %p146 = scmp.eq.s32.totalorder %s15, 1
      %p147 = por %p145, %p146
      %p148 = scmp.ne.s32.totalorder %s140, %s143
      %p149 = scmp.eq.s32.totalorder %s15, 0
      %p150 = por %p148, %p149
      %p151 = scmp.ne.s32.totalorder %s140, %s143
      %p152 = scmp.eq.s32.totalorder %s20, 1
      %p153 = por %p151, %p152
      %p154 = scmp.ne.s32.totalorder %s143, %s144
      %p155 = scmp.eq.s32.totalorder %s20, 0
      %p156 = por %p154, %p155
      %p157 = scmp.ne.s32.totalorder %s143, %s144
      %p158 = scmp.eq.s32.totalorder %s21, 1
      %p159 = por %p157, %p158
      %p161 = scmp.ne.s32.totalorder %s144, %s160
      %p162 = scmp.eq.s32.totalorder %s21, 0
      %p163 = por %p161, %p162
      %p164 = scmp.le.s32.totalorder 1, %s15
      %p165 = scmp.lt.s32.totalorder %s15, 3
      %p166 = pnand %p164, %p165
      %p167 = pneg %p166
      // Predicated region
      $region9: #{tpu_custom_call.1} parent=5 // pred_check
        _
      $region10: #{tpu_custom_call.1} parent=5 // pred_check_branch
        %169 = sbr.rel (%p166) target = $region12
      $region11: #{tpu_custom_call.1} parent=5 // pred_region
        %s170 = ssub.s32 %s15, 1
        // Predicated region
        $region13: #{tpu_custom_call.1} parent=11 // pred_check
          %p171 = pneg %p48
        $region14: #{tpu_custom_call.1} parent=11 // pred_check_branch
          %173 = sbr.rel (%p171) target = $region16
        $region15: #{tpu_custom_call.1} parent=11 // pred_region
          %s175 = ssub.s32 64, 64
          %176 = vsyncadd [#allocation3], %s175
          %s178 = sshll.u32 [#allocation2], 4
          %s179 = int_to_ptr.vmem [resolvable:$true] %s178
          %181 = dma.hbm_to_vmem [thread:$0]  %s0, 64, %s179, [#allocation3]
        $region16: #{tpu_custom_call.1} parent=11 // pred_fallthru
          _
        // Predicated region
        $region17: #{tpu_custom_call.1} parent=11 // pred_check
          %p182 = pneg %p74
        $region18: #{tpu_custom_call.1} parent=11 // pred_check_branch
          %184 = sbr.rel (%p182) target = $region20
        $region19: #{tpu_custom_call.1} parent=11 // pred_region
          %s186 = ssub.s32 64, 64
          %187 = vsyncadd [#allocation6], %s186
          %s188 = smul.addr %s25, 64
          %s189 = scalar_lea.hbm %s1, %s188
          %s191 = sshll.u32 [#allocation5], 4
          %s192 = int_to_ptr.vmem [resolvable:$true] %s191
          %194 = dma.hbm_to_vmem [thread:$0]  %s189, 64, %s192, [#allocation6]
        $region20: #{tpu_custom_call.1} parent=11 // pred_fallthru
          _
        // Predicated region
        $region21: #{tpu_custom_call.1} parent=11 // pred_check
          %p195 = pneg %p100
        $region22: #{tpu_custom_call.1} parent=11 // pred_check_branch
          %197 = sbr.rel (%p195) target = $region24
        $region23: #{tpu_custom_call.1} parent=11 // pred_region
          %p198 = scmp.lt.s32.totalorder %s25, 0
          %s199 = scalar_select %p198, %s25, 0
          %s200 = smul.addr %s199, 4
          %s201 = scalar_lea.vmem %s2, %s200
        $region24: #{tpu_custom_call.1} parent=11 // pred_fallthru
          _
      $region12: #{tpu_custom_call.1} parent=5 // pred_fallthru
        _
      %p202 = scmp.lt.s32.totalorder %s15, 2
      // Predicated region
      $region25: #{tpu_custom_call.1} parent=5 // pred_check
        %p203 = pneg %p202
      $region26: #{tpu_custom_call.1} parent=5 // pred_check_branch
        %205 = sbr.rel (%p203) target = $region28
      $region27: #{tpu_custom_call.1} parent=5 // pred_region
        // Predicated region
        $region29: #{tpu_custom_call.1} parent=27 // pred_check
          %p206 = pneg %p122
        $region30: #{tpu_custom_call.1} parent=27 // pred_check_branch
          %208 = sbr.rel (%p206) target = $region32
        $region31: #{tpu_custom_call.1} parent=27 // pred_region
          %p209 = scmp.lt.s32.totalorder %s22, 1
          %s210 = scalar_select %p209, %s22, 1
          %p211 = scmp.lt.s32.totalorder %s23, 0
          %s212 = scalar_select %p211, %s23, 0
          %s213 = smul.addr %s212, 2
          %s214 = smul.addr %s210, 2
          %s215 = sadd.s32 %s213, %s214
          %s216 = smul.addr %s215, 4
          %s217 = scalar_lea.vmem %s3, %s216
        $region32: #{tpu_custom_call.1} parent=27 // pred_fallthru
          _
      $region28: #{tpu_custom_call.1} parent=5 // pred_fallthru
        _
      %p218 = scmp.le.s32.totalorder 1, %s15
      %p219 = scmp.lt.s32.totalorder %s15, 3
      %p220 = pnand %p218, %p219
      %p221 = pneg %p220
      // Predicated region
      $region33: #{tpu_custom_call.1} parent=5 // pred_check
        _
      $region34: #{tpu_custom_call.1} parent=5 // pred_check_branch
        %223 = sbr.rel (%p220) target = $region36
      $region35: #{tpu_custom_call.1} parent=5 // pred_region
        %s224 = ssub.s32 %s15, 1
        // Predicated region
        $region37: #{tpu_custom_call.1} parent=35 // pred_check
          %p225 = pneg %p48
        $region38: #{tpu_custom_call.1} parent=35 // pred_check_branch
          %227 = sbr.rel (%p225) target = $region40
        $region39: #{tpu_custom_call.1} parent=35 // pred_region
          %228 = dma.done [#allocation3], 64
        $region40: #{tpu_custom_call.1} parent=35 // pred_fallthru
          _
        // Predicated region
        $region41: #{tpu_custom_call.1} parent=35 // pred_check
          %p229 = pneg %p74
        $region42: #{tpu_custom_call.1} parent=35 // pred_check_branch
          %231 = sbr.rel (%p229) target = $region44
        $region43: #{tpu_custom_call.1} parent=35 // pred_region
          %232 = dma.done [#allocation6], 64
        $region44: #{tpu_custom_call.1} parent=35 // pred_fallthru
          _
        %p233 = pneg %p48
        %p234 = pneg %p45
        %p235 = pneg %p74
        %p236 = pneg %p71
        %p237 = scmp.lt.s32.totalorder %s25, 0
        %s238 = scalar_select %p237, %s25, 0
        %s239 = smul.addr %s238, 4
        %s240 = scalar_lea.vmem %s2, %s239
        %p241 = pneg %p100
        %p242 = pneg %p97
        %p243 = scmp.lt.s32.totalorder %s24, 1
        %s244 = scalar_select %p243, %s24, 1
        %p245 = scmp.lt.s32.totalorder %s25, 0
        %s246 = scalar_select %p245, %s25, 0
        %s247 = smul.addr %s246, 2
        %s248 = smul.addr %s244, 2
        %s249 = sadd.s32 %s247, %s248
        %s250 = smul.addr %s249, 4
        %s251 = scalar_lea.vmem %s3, %s250
        %p252 = pneg %p128
        %p253 = pneg %p125
        %p254 = pneg %p156
        %p255 = pneg %p153
        %s256 = sand.u32 %s143, 1
        %s257 = scalar_lea.sflag [#allocation4], %s256
        %s258 = sand.u32 %s143, 1
        %s259 = smul.addr %s258, 8
        %s260 = scalar_lea.vmem [#allocation7], %s259
        %p261 = scmp.lt.s32.totalorder %s25, 0
        %s262 = scalar_select %p261, %s25, 0
        %s263 = smul.addr %s262, 4
        %s264 = scalar_lea.vmem %s2, %s263
        %p265 = scmp.lt.s32.totalorder %s24, 1
        %s266 = scalar_select %p265, %s24, 1
        %p267 = scmp.lt.s32.totalorder %s25, 0
        %s268 = scalar_select %p267, %s25, 0
        %s269 = smul.addr %s268, 2
        %s270 = smul.addr %s266, 2
        %s271 = sadd.s32 %s269, %s270
        %s272 = smul.addr %s271, 4
        %s273 = scalar_lea.vmem %s3, %s272
        %v274 = vld [vmem:[%s273] sm:$0xff]
        %v275 = vld [vmem:[#allocation5] sm:$0xf]
        %v276 = vld [vmem:[%s264] sm:$0xf]
        %v277 = vld [vmem:[#allocation2] ss:$2 sm:$0x3]
        %v278 = vlaneseq
        %v279 = vshrl.u32 %v278, 7
        %v280 = vsub.s32 0, %v279
        %v281 = vrot.slane %v277, %v280
        %v282 = vlaneseq
        %v283 = vshrl.u32 %v282, 7
        %v284 = vsub.s32 1, %v283
        %v285 = vrot.slane %v277, %v284
        %s286 = scalar_lea.vmem [#allocation2], 1
        %v287 = vld [vmem:[%s286] ss:$2 sm:$0x3]
        %v288 = vlaneseq
        %v289 = vshrl.u32 %v288, 7
        %v290 = vsub.s32 0, %v289
        %v291 = vrot.slane %v287, %v290
        %v292 = vlaneseq
        %v293 = vshrl.u32 %v292, 7
        %v294 = vsub.s32 1, %v293
        %v295 = vrot.slane %v287, %v294
        %vm296 = vcmp.ge.s32.totalorder %v281, 1
        %vm297 = vcmp.ge.s32.totalorder %v285, 1
        %vm298 = vcmp.le.s32.totalorder %v281, 14
        %vm299 = vcmp.le.s32.totalorder %v285, 14
        %vm300 = vcmp.ge.s32.totalorder %v291, 1
        %vm301 = vcmp.ge.s32.totalorder %v295, 1
        %vm302 = vcmp.le.s32.totalorder %v291, 14
        %vm303 = vcmp.le.s32.totalorder %v295, 14
        %305 = vset.pattern.permute.xlu0 4
        %306 = vperm.xlu0 %305, %v275
        %v307 = vpop.permute.xlu0 %306
        %v309 = vunpack.c.l.s4 839922192
        %v310 = vunpack.c.0.s8 %v309
        %v311 = vlaneseq
        %v312 = vshrl.u32 %v311, 7
        %v313 = vsub.s32 %v310, %v312
        %v314 = vrot.slane %v307, %v313
        %v316 = vmul.f32 %v274, %v314
        %318 = vset.pattern.permute.xlu0 0
        %319 = vperm.xlu0 %318, %v276
        %v320 = vpop.permute.xlu0 %319
        %v322 = vunpack.c.l.s4 839922192
        %v323 = vunpack.c.0.s8 %v322
        %v324 = vlaneseq
        %v325 = vshrl.u32 %v324, 7
        %v326 = vsub.s32 %v323, %v325
        %v327 = vrot.slane %v320, %v326
        %v329 = vadd.f32 %v316, %v327
        %v331 = vcombine.high %v274, %v274
        %333 = vrot.lane.b32.xlu0 %v274, 17
        %v334 = vpop.permute.xlu0 %333
        %335 = vrot.lane.b32.xlu0 %v331, 17
        %v336 = vpop.permute.xlu0 %335
        %v337 = vlaneseq
        %v338 = vand.u32 %v337, 127
        %vm339 = vcmp.lt.s32.totalorder %v338, 17
        %v340 = vsel %vm339, %v334, %v336
        %v341 = vsel %vm339, %v336, %v334
        %vm342 = vmand %vm296, %vm300
        %vm343 = vmand %vm297, %vm301
        %344 = vset.pattern.permute.xlu0 0
        %345 = vperm.xlu0 %344, %v275
        %v346 = vpop.permute.xlu0 %345
        %v348 = vmul.f32 %v341, %v346
        %v349 = vmul.f32 %v340, %v346
        %v350 = vsel %vm342, %v348, 0.0
        %v351 = vsel %vm343, %v349, 0.0
        %v354 = vcombine.low %v350, %v351
        %v356 = vadd.f32 %v329, %v354
        %357 = vrot.lane.b32.xlu0 %v274, 16
        %v358 = vpop.permute.xlu0 %357
        %359 = vrot.lane.b32.xlu0 %v331, 16
        %v360 = vpop.permute.xlu0 %359
        %vm361 = vcmp.lt.s32.totalorder %v338, 16
        %v362 = vsel %vm361, %v358, %v360
        %v363 = vsel %vm361, %v360, %v358
        %364 = vset.pattern.permute.xlu0 1
        %365 = vperm.xlu0 %364, %v275
        %v366 = vpop.permute.xlu0 %365
        %v368 = vmul.f32 %v363, %v366
        %v369 = vmul.f32 %v362, %v366
        %v370 = vsel %vm296, %v368, 0.0
        %v371 = vsel %vm297, %v369, 0.0
        %v374 = vcombine.low %v370, %v371
        %v376 = vadd.f32 %v356, %v374
        %377 = vrot.lane.b32.xlu0 %v274, 15
        %v378 = vpop.permute.xlu0 %377
        %379 = vrot.lane.b32.xlu0 %v331, 15
        %v380 = vpop.permute.xlu0 %379
        %vm381 = vcmp.lt.s32.totalorder %v338, 15
        %v382 = vsel %vm381, %v378, %v380
        %v383 = vsel %vm381, %v380, %v378
        %vm384 = vmand %vm296, %vm302
        %vm385 = vmand %vm297, %vm303
        %386 = vset.pattern.permute.xlu0 2
        %387 = vperm.xlu0 %386, %v275
        %v388 = vpop.permute.xlu0 %387
        %v390 = vmul.f32 %v383, %v388
        %v391 = vmul.f32 %v382, %v388
        %v392 = vsel %vm384, %v390, 0.0
        %v393 = vsel %vm385, %v391, 0.0
        %v396 = vcombine.low %v392, %v393
        %v398 = vadd.f32 %v376, %v396
        %399 = vrot.lane.b32.xlu0 %v274, 1
        %v400 = vpop.permute.xlu0 %399
        %401 = vrot.lane.b32.xlu0 %v331, 1
        %v402 = vpop.permute.xlu0 %401
        %vm403 = vcmp.lt.s32.totalorder %v338, 1
        %v404 = vsel %vm403, %v400, %v402
        %v405 = vsel %vm403, %v402, %v400
        %406 = vset.pattern.permute.xlu0 3
        %407 = vperm.xlu0 %406, %v275
        %v408 = vpop.permute.xlu0 %407
        %v410 = vmul.f32 %v405, %v408
        %v411 = vmul.f32 %v404, %v408
        %v412 = vsel %vm300, %v410, 0.0
        %v413 = vsel %vm301, %v411, 0.0
        %v416 = vcombine.low %v412, %v413
        %v418 = vadd.f32 %v398, %v416
        %419 = vrot.lane.b32.xlu0 %v274, 127
        %v420 = vpop.permute.xlu0 %419
        %421 = vrot.lane.b32.xlu0 %v331, 127
        %v422 = vpop.permute.xlu0 %421
        %vm423 = vcmp.lt.s32.totalorder %v338, 127
        %v424 = vsel %vm423, %v420, %v422
        %v425 = vsel %vm423, %v422, %v420
        %426 = vset.pattern.permute.xlu0 5
        %427 = vperm.xlu0 %426, %v275
        %v428 = vpop.permute.xlu0 %427
        %v430 = vmul.f32 %v424, %v428
        %v431 = vmul.f32 %v425, %v428
        %v432 = vsel %vm302, %v430, 0.0
        %v433 = vsel %vm303, %v431, 0.0
        %v436 = vcombine.low %v432, %v433
        %v438 = vadd.f32 %v418, %v436
        %439 = vrot.lane.b32.xlu0 %v274, 113
        %v440 = vpop.permute.xlu0 %439
        %441 = vrot.lane.b32.xlu0 %v331, 113
        %v442 = vpop.permute.xlu0 %441
        %vm443 = vcmp.lt.s32.totalorder %v338, 113
        %v444 = vsel %vm443, %v440, %v442
        %v445 = vsel %vm443, %v442, %v440
        %vm446 = vmand %vm298, %vm300
        %vm447 = vmand %vm299, %vm301
        %448 = vset.pattern.permute.xlu0 6
        %449 = vperm.xlu0 %448, %v275
        %v450 = vpop.permute.xlu0 %449
        %v452 = vmul.f32 %v444, %v450
        %v453 = vmul.f32 %v445, %v450
        %v454 = vsel %vm446, %v452, 0.0
        %v455 = vsel %vm447, %v453, 0.0
        %v458 = vcombine.low %v454, %v455
        %v460 = vadd.f32 %v438, %v458
        %461 = vrot.lane.b32.xlu0 %v274, 112
        %v462 = vpop.permute.xlu0 %461
        %463 = vrot.lane.b32.xlu0 %v331, 112
        %v464 = vpop.permute.xlu0 %463
        %vm465 = vcmp.lt.s32.totalorder %v338, 112
        %v466 = vsel %vm465, %v462, %v464
        %v467 = vsel %vm465, %v464, %v462
        %468 = vset.pattern.permute.xlu0 7
        %469 = vperm.xlu0 %468, %v275
        %v470 = vpop.permute.xlu0 %469
        %v472 = vmul.f32 %v466, %v470
        %v473 = vmul.f32 %v467, %v470
        %v474 = vsel %vm298, %v472, 0.0
        %v475 = vsel %vm299, %v473, 0.0
        %v478 = vcombine.low %v474, %v475
        %v480 = vadd.f32 %v460, %v478
        %481 = vrot.lane.b32.xlu0 %v274, 111
        %v482 = vpop.permute.xlu0 %481
        %483 = vrot.lane.b32.xlu0 %v331, 111
        %v484 = vpop.permute.xlu0 %483
        %vm485 = vcmp.lt.s32.totalorder %v338, 111
        %v486 = vsel %vm485, %v482, %v484
        %v487 = vsel %vm485, %v484, %v482
        %vm488 = vmand %vm298, %vm302
        %vm489 = vmand %vm299, %vm303
        %490 = vset.pattern.permute.xlu0 8
        %491 = vperm.xlu0 %490, %v275
        %v492 = vpop.permute.xlu0 %491
        %v494 = vmul.f32 %v486, %v492
        %v495 = vmul.f32 %v487, %v492
        %v496 = vsel %vm488, %v494, 0.0
        %v497 = vsel %vm489, %v495, 0.0
        %v500 = vcombine.low %v496, %v497
        %v502 = vadd.f32 %v480, %v500
        %503 = vst [vmem:[%s260] sm:$0xff] %v502
        %s504 = sand.u32 %s143, 1
        %s505 = scalar_lea.sflag [#allocation4], %s504
        %s506 = sand.u32 %s143, 1
        %s507 = smul.addr %s506, 8
        %s508 = scalar_lea.vmem [#allocation7], %s507
        // Predicated region
        $region45: #{tpu_custom_call.1} parent=35 // pred_check
          %p509 = pneg %p153
        $region46: #{tpu_custom_call.1} parent=35 // pred_check_branch
          %511 = sbr.rel (%p509) target = $region48
        $region47: #{tpu_custom_call.1} parent=35 // pred_region
          %s513 = ssub.s32 128, 128
          %514 = vsyncadd %s505, %s513
          %s515 = smul.addr %s25, 2
          %s516 = smul.addr %s24, 2
          %s517 = sadd.s32 %s515, %s516
          %s518 = smul.addr %s517, 64
          %s519 = scalar_lea.hbm %s4, %s518
          %s521 = sshll.u32 %s508, 4
          %s522 = int_to_ptr.vmem [resolvable:$true] %s521
          %524 = dma.vmem_to_hbm [thread:$0]  %s522, 128, %s519, %s505
        $region48: #{tpu_custom_call.1} parent=35 // pred_fallthru
          _
      $region36: #{tpu_custom_call.1} parent=5 // pred_fallthru
        _
      %p525 = scmp.le.s32.totalorder 2, %s15
      // Predicated region
      $region49: #{tpu_custom_call.1} parent=5 // pred_check
        %p526 = pneg %p525
      $region50: #{tpu_custom_call.1} parent=5 // pred_check_branch
        %528 = sbr.rel (%p526) target = $region52
      $region51: #{tpu_custom_call.1} parent=5 // pred_region
        %s529 = ssub.s32 %s15, 2
        // Predicated region
        $region53: #{tpu_custom_call.1} parent=51 // pred_check
          %p530 = pneg %p159
        $region54: #{tpu_custom_call.1} parent=51 // pred_check_branch
          %532 = sbr.rel (%p530) target = $region56
        $region55: #{tpu_custom_call.1} parent=51 // pred_region
          %s533 = sand.u32 %s144, 1
          %s534 = scalar_lea.sflag [#allocation4], %s533
          %s535 = sand.u32 %s144, 1
          %s536 = smul.addr %s535, 8
          %s537 = scalar_lea.vmem [#allocation7], %s536
          %538 = dma.done %s534, 128
        $region56: #{tpu_custom_call.1} parent=51 // pred_fallthru
          _
      $region52: #{tpu_custom_call.1} parent=5 // pred_fallthru
        _
    $region6: #{tpu_custom_call.1} parent=1 // loop_footer
      %s19 = sadd.s32 1, %s15
    $region7: #{tpu_custom_call.1} parent=1 // loop_footer_branch
      %14 = sbr.rel target = $region3
    $region8: #{tpu_custom_call.1} parent=1 // loop_exit
      _
    %539 = vsyncpa [#allocation3], 1
    %s540 = scalar_lea.sflag [#allocation3], 1
    %541 = vsyncpa %s540, 1
    %542 = vsyncpa [#allocation6], 1
    %543 = vsyncpa [#allocation4], 1
    %s544 = scalar_lea.sflag [#allocation4], 1
    %545 = vsyncpa %s544, 1

</llo_original>
